<compile_context>
chip_gen: v5e
topology: v5e:2x2
jax: 0.10.0
libtpu: 0.0.40
codegen_flags: <defaults>
</compile_context>

<pallas_src>
import math
import numpy as np
import jax
import jax.numpy as jnp
from jax.experimental import pallas as pl
from jax.experimental.pallas import tpu as pltpu

# ----------------------------- configuration --------------------------------
B, C, H, W = 2, 3, 16, 16            # input images (B, C, H, W)
PATCH = 2                            # synthetic feature-extractor patch size
HF, WF = H // PATCH, W // PATCH      # feature-map spatial size (8, 8)
K_IN = C * PATCH * PATCH             # 12
D = 32                               # feature dim
N_MEM = 64                           # memory-bank size
SIGMA = 0.75                         # gaussian blur sigma
FILT = int(round(4 * SIGMA))         # 3  (odd -> symmetric 'same' padding)
NP_TOK = HF * WF                     # patches per image (64)
HW = H * W                           # 256
BNP = B * NP_TOK                     # 128  (lane axis of batched patch layout)
BHW = B * HW                         # 512  (lane axis of pixel-score output)


# --------------------------- host-side constants -----------------------------
def gaussian_kernel_2d(sigma: float) -> np.ndarray:
    """Exactly reproduces the 2-D blur kernel built in PatchCore.__init__
    (center = fs/2 and the unusual normalization are intentional: faithful
    to the reference)."""
    fs = int(round(4 * sigma))
    k = np.zeros((fs, fs), np.float64)
    center = fs / 2.0
    for i in range(fs):
        for j in range(fs):
            r2 = (i - center) ** 2 + (j - center) ** 2
            k[i, j] = math.exp(-r2 / (2 * sigma ** 2) / (2 * math.pi * sigma ** 2))
    return k


def gaussian_kernel_1d(sigma: float) -> np.ndarray:
    """1-D factor of the (exactly separable) __init__ kernel: k2d = outer(g, g)."""
    fs = int(round(4 * sigma))
    center = fs / 2.0
    a = 1.0 / (2 * sigma ** 2) / (2 * math.pi * sigma ** 2)
    return np.array([math.exp(-((i - center) ** 2) * a) for i in range(fs)],
                    np.float64)


def bilinear_matrix(out_size: int, in_size: int) -> np.ndarray:
    """1-D interp matrix matching F.interpolate(mode='bilinear', align_corners=False)."""
    scale = in_size / out_size
    m = np.zeros((out_size, in_size), np.float64)
    for i in range(out_size):
        src = max((i + 0.5) * scale - 0.5, 0.0)
        i0 = min(int(math.floor(src)), in_size - 1)
        i1 = min(i0 + 1, in_size - 1)
        l1 = src - i0
        m[i, i0] += 1.0 - l1
        m[i, i1] += l1
    return m


def reflect_conv_matrix(size: int, g1d: np.ndarray) -> np.ndarray:
    """Matrix form of 1-D cross-correlation with reflect 'same' padding
    (torch Conv2d(padding='same', padding_mode='reflect') semantics)."""
    fs = len(g1d)
    left = (fs - 1) // 2
    m = np.zeros((size, size), np.float64)
    for o in range(size):
        for i in range(fs):
            src = o + i - left
            if src < 0:
                src = -src
            if src > size - 1:
                src = 2 * (size - 1) - src
            m[o, src] += g1d[i]
    return m


def build_fold_matrix() -> np.ndarray:
    """(NP_TOK, H*W) matrix folding bilinear upsample + reflect-pad + Gaussian
    blur into one matmul:  out_flat_row = dmin_row @ fold."""
    wr = bilinear_matrix(H, HF)                       # (H, HF)
    wc = bilinear_matrix(W, WF)                       # (W, WF)
    g = gaussian_kernel_1d(SIGMA)
    a_row = reflect_conv_matrix(H, g) @ wr            # (H, HF)  rows: blur∘resize
    b_col = reflect_conv_matrix(W, g) @ wc            # (W, WF)  cols: blur∘resize
    # vec(A P B^T) = kron(A, B) vec(P)   (row-major vec)
    return np.kron(a_row, b_col).T.astype(np.float32)  # (HF*WF, H*W) = (64, 256)


def build_block_diag_fold() -> np.ndarray:
    """Block-diagonal fold (B*NP_TOK, B*HW): one matmul handles all B images
    while keeping the pixel-score output a single fully lane-dense row."""
    fold = build_fold_matrix()                                    # (64, 256)
    return np.kron(np.eye(B, dtype=np.float32), fold).astype(np.float32)  # (128, 512)


# ------------------------------- fused kernel --------------------------------
def _patchcore_kernel(pt_ref, wt_ref, memn2_ref, m2_ref, fold_ref, pix_ref, img_ref):
    # pt_ref    : (K_IN, B*NP_TOK)  patch pixels, batch merged into the lane axis
    # wt_ref    : (D, K_IN)         transposed projection weights
    # memn2_ref : (N_MEM, D)        -2 * memory bank (constant folded host-side)
    # m2_ref    : (N_MEM, 1)        precomputed ||m||^2 (column)
    # fold_ref  : (B*NP_TOK, B*HW)  block-diagonal bilinear+blur matrix
    # pix_ref   : (1, B*HW)         lane-dense pixel-score output
    # img_ref   : (B, 1)            image-score output
    pt = pt_ref[...]                                                       # (12, 128)

    # feature extractor: features along sublanes, batch*patches along lanes
    ft = jnp.dot(wt_ref[...], pt, preferred_element_type=jnp.float32)      # (D, BNP)
    # scorer: squared L2 distance to every memory entry (f32 throughout)
    gt = jnp.dot(memn2_ref[...], ft, preferred_element_type=jnp.float32)   # -2<m,f>
    f2 = jnp.sum(ft * ft, axis=0, keepdims=True)                           # (1, BNP)
    d2 = jnp.maximum(f2 + gt + m2_ref[...], 0.0)                           # (N_MEM, BNP)
    dmin = jnp.sqrt(jnp.min(d2, axis=0, keepdims=True))                    # (1, BNP)

    # image scores: masked lane-max per image (dmin >= 0, so 0 is a safe fill)
    lane = jax.lax.broadcasted_iota(jnp.int32, (1, BNP), 1)
    for b in range(B):                                  # tiny static loop, unrolled
        in_b = jnp.logical_and(lane >= b * NP_TOK, lane < (b + 1) * NP_TOK)
        img_ref[b:b + 1, :] = jnp.max(jnp.where(in_b, dmin, 0.0),
                                      axis=1, keepdims=True)               # (1, 1)

    # folded bilinear-resize + reflect-pad + gaussian blur for all B images:
    # a single lane-dense matmul -> (1, B*HW) unmasked store.
    pix_ref[...] = jnp.dot(dmin, fold_ref[...], preferred_element_type=jnp.float32)


_VMEM_SPEC = pl.BlockSpec(memory_space=pltpu.MemorySpace.VMEM)

_fused_call = pl.pallas_call(
    _patchcore_kernel,
    out_shape=(jax.ShapeDtypeStruct((1, BHW), jnp.float32),
               jax.ShapeDtypeStruct((B, 1), jnp.float32)),
    in_specs=[_VMEM_SPEC] * 5,
    out_specs=(_VMEM_SPEC, _VMEM_SPEC),
    compiler_params=pltpu.CompilerParams(
        # Let the tiny wrapper-side patch transpose fuse into the input DMA of
        # the first operand instead of a standalone XLA op + HBM round-trip.
        allow_input_fusion=[True, False, False, False, False]),
)


# --------------------------------- wrapper ------------------------------------
def patchcore_forward(x, w_t, mem_neg2, m2_col, fold_bd):
    """Returns (image_scores (B,), pixel_scores (B, H, W)) — same as PyTorch."""
    if x.ndim < 4:
        x = x[None]
    # synthetic feature-extractor front-end: PATCHxPATCH patch extraction, laid
    # out transposed (K_IN along sublanes, B*patches along lanes) — glue only;
    # fused into the pallas_call input DMA via allow_input_fusion.
    xb = x.reshape(B, C, HF, PATCH, WF, PATCH)
    pt = xb.transpose(1, 3, 5, 0, 2, 4).reshape(K_IN, BNP)
    pix_flat, img = _fused_call(pt, w_t, mem_neg2, m2_col, fold_bd)
    # TODO(synk): scorer.b (top-b neighbour re-weighting via set_b) is not used
    # in the reference forward and is therefore not implemented.
    return img[:, 0], pix_flat.reshape(B, H, W)


# --------------------------- pure-JAX reference -------------------------------
def reference_forward(x, w_proj, memory):
    """Staged (un-fused) reference matching the original module semantics."""
    xb = x.reshape(B, C, HF, PATCH, WF, PATCH)
    patches = xb.transpose(0, 2, 4, 1, 3, 5).reshape(B * NP_TOK, K_IN)
    feats = patches @ w_proj                                            # (B*NP, D)
    d2 = jnp.sum((feats[:, None, :] - memory[None, :, :]) ** 2, axis=-1)
    dmin = jnp.sqrt(jnp.min(d2, axis=-1)).reshape(B, HF, WF)
    img = jnp.max(dmin.reshape(B, -1), axis=-1)
    wr = jnp.asarray(bilinear_matrix(H, HF), jnp.float32)
    wc = jnp.asarray(bilinear_matrix(W, WF), jnp.float32)
    up = jnp.einsum('hu,buv,wv->bhw', wr, dmin, wc)
    k2 = jnp.asarray(gaussian_kernel_2d(SIGMA), jnp.float32)
    left = (FILT - 1) // 2
    right = FILT - 1 - left
    pad = jnp.pad(up, ((0, 0), (left, right), (left, right)), mode="reflect")
    out = jnp.zeros((B, H, W), jnp.float32)
    for i in range(FILT):
        for j in range(FILT):
            out = out + k2[i, j] * pad[:, i:i + H, j:j + W]
    return img, out


# ----------------------------------- main --------------------------------------
if __name__ == "__main__":
    key = jax.random.PRNGKey(0)
    kx, kw, km = jax.random.split(key, 3)
    x = jax.random.normal(kx, (B, C, H, W), jnp.float32)
    w_proj = 0.1 * jax.random.normal(kw, (K_IN, D), jnp.float32)
    memory = jax.random.normal(km, (N_MEM, D), jnp.float32)

    # host-side constants (computed once, never recomputed inside the kernel)
    w_t = jnp.asarray(w_proj).T                                   # (D, K_IN)
    mem_neg2 = -2.0 * memory                                      # (N_MEM, D)
    m2_col = jnp.sum(memory * memory, axis=1, keepdims=True)      # (N_MEM, 1)
    fold_bd = jnp.asarray(build_block_diag_fold())                # (BNP, BHW)

    fwd = jax.jit(patchcore_forward)
    image_scores, pixel_scores = fwd(x, w_t, mem_neg2, m2_col, fold_bd)
    jax.block_until_ready((image_scores, pixel_scores))

    assert image_scores.shape == (B,)
    assert pixel_scores.shape == (B, H, W)
    assert bool(jnp.all(jnp.isfinite(image_scores)))
    assert bool(jnp.all(jnp.isfinite(pixel_scores)))

    ref_img, ref_pix = reference_forward(x, w_proj, memory)
    assert np.allclose(np.asarray(image_scores), np.asarray(ref_img),
                       rtol=1e-3, atol=1e-3)
    assert np.allclose(np.asarray(pixel_scores), np.asarray(ref_pix),
                       rtol=1e-3, atol=1e-3)
    print("KERNEL_OK")
</pallas_src>

<mosaic_0001>
module attributes {stable_mosaic.version = 11 : i64} {
  func.func @_patchcore_kernel(%arg0: memref<12x128xf32, #tpu.memory_space<vmem>>, %arg1: memref<32x12xf32, #tpu.memory_space<vmem>>, %arg2: memref<64x32xf32, #tpu.memory_space<vmem>>, %arg3: memref<64x1xf32, #tpu.memory_space<vmem>>, %arg4: memref<128x512xf32, #tpu.memory_space<vmem>>, %arg5: memref<1x512xf32, #tpu.memory_space<vmem>>, %arg6: memref<2x1xf32, #tpu.memory_space<vmem>>) attributes {dimension_semantics = [], scalar_prefetch = 0 : i64, scratch_operands = 0 : i64, tpu.core_type = #tpu.core_type<tc>} {
    %c0 = arith.constant 0 : index
    %c0_0 = arith.constant 0 : index
    %0 = vector.load %arg0[%c0, %c0_0] : memref<12x128xf32, #tpu.memory_space<vmem>>, vector<12x128xf32>
    %c0_1 = arith.constant 0 : index
    %c0_2 = arith.constant 0 : index
    %1 = vector.load %arg1[%c0_1, %c0_2] : memref<32x12xf32, #tpu.memory_space<vmem>>, vector<32x12xf32>
    %cst = arith.constant dense<0.000000e+00> : vector<32x128xf32>
    %2 = tpu.matmul %1, %0, %cst {dimension_numbers = #tpu.dot_dimension_numbers<[1], [0], [0], [1], [0, 0, 1, 1], [], []>} : vector<32x12xf32>, vector<12x128xf32>, vector<32x128xf32> -> vector<32x128xf32>
    %c0_3 = arith.constant 0 : index
    %c0_4 = arith.constant 0 : index
    %3 = vector.load %arg2[%c0_3, %c0_4] : memref<64x32xf32, #tpu.memory_space<vmem>>, vector<64x32xf32>
    %cst_5 = arith.constant dense<0.000000e+00> : vector<64x128xf32>
    %4 = tpu.matmul %3, %2, %cst_5 {dimension_numbers = #tpu.dot_dimension_numbers<[1], [0], [0], [1], [0, 0, 1, 1], [], []>} : vector<64x32xf32>, vector<32x128xf32>, vector<64x128xf32> -> vector<64x128xf32>
    %5 = arith.mulf %2, %2 : vector<32x128xf32>
    %cst_6 = arith.constant dense<0.000000e+00> : vector<128xf32>
    %6 = vector.multi_reduction <add>, %5, %cst_6 [0] : vector<32x128xf32> to vector<128xf32>
    %7 = vector.shape_cast %6 : vector<128xf32> to vector<1x128xf32>
    %8 = vector.broadcast %7 : vector<1x128xf32> to vector<64x128xf32>
    %9 = arith.addf %8, %4 : vector<64x128xf32>
    %c0_7 = arith.constant 0 : index
    %c0_8 = arith.constant 0 : index
    %10 = vector.load %arg3[%c0_7, %c0_8] : memref<64x1xf32, #tpu.memory_space<vmem>>, vector<64x1xf32>
    %11 = vector.broadcast %10 : vector<64x1xf32> to vector<64x128xf32>
    %12 = arith.addf %9, %11 : vector<64x128xf32>
    %cst_9 = arith.constant 0.000000e+00 : f32
    %13 = vector.broadcast %cst_9 : f32 to vector<64x128xf32>
    %14 = arith.maximumf %12, %13 : vector<64x128xf32>
    %cst_10 = arith.constant dense<0x7F800000> : vector<128xf32>
    %15 = vector.multi_reduction <minimumf>, %14, %cst_10 [0] : vector<64x128xf32> to vector<128xf32>
    %16 = vector.shape_cast %15 : vector<128xf32> to vector<1x128xf32>
    %17 = math.sqrt %16 : vector<1x128xf32>
    %18 = tpu.iota {dimensions = array<i32: 1>} : vector<1x128xi32>
    %c0_i32 = arith.constant 0 : i32
    %19 = vector.broadcast %c0_i32 : i32 to vector<1x128xi32>
    %20 = arith.cmpi sge, %18, %19 : vector<1x128xi32>
    %c64_i32 = arith.constant 64 : i32
    %21 = vector.broadcast %c64_i32 : i32 to vector<1x128xi32>
    %22 = arith.cmpi slt, %18, %21 : vector<1x128xi32>
    %23 = arith.andi %20, %22 : vector<1x128xi1>
    %cst_11 = arith.constant 0.000000e+00 : f32
    %24 = vector.broadcast %cst_11 : f32 to vector<1x128xf32>
    %25 = arith.select %23, %17, %24 : vector<1x128xi1>, vector<1x128xf32>
    %cst_12 = arith.constant dense<0xFF800000> : vector<1xf32>
    %26 = vector.multi_reduction <maximumf>, %25, %cst_12 [1] : vector<1x128xf32> to vector<1xf32>
    %27 = vector.shape_cast %26 : vector<1xf32> to vector<1x1xf32>
    %c0_13 = arith.constant 0 : index
    %c0_14 = arith.constant 0 : index
    %28 = vector.load %arg6[%c0_13, %c0_14] : memref<2x1xf32, #tpu.memory_space<vmem>>, vector<1x1xf32>
    tpu.vector_store %arg6[%c0_13, %c0_14], %27 {strides = array<i32>} : memref<2x1xf32, #tpu.memory_space<vmem>>, vector<1x1xf32>,
    %c64_i32_15 = arith.constant 64 : i32
    %29 = vector.broadcast %c64_i32_15 : i32 to vector<1x128xi32>
    %30 = arith.cmpi sge, %18, %29 : vector<1x128xi32>
    %c128_i32 = arith.constant 128 : i32
    %31 = vector.broadcast %c128_i32 : i32 to vector<1x128xi32>
    %32 = arith.cmpi slt, %18, %31 : vector<1x128xi32>
    %33 = arith.andi %30, %32 : vector<1x128xi1>
    %cst_16 = arith.constant 0.000000e+00 : f32
    %34 = vector.broadcast %cst_16 : f32 to vector<1x128xf32>
    %35 = arith.select %33, %17, %34 : vector<1x128xi1>, vector<1x128xf32>
    %cst_17 = arith.constant dense<0xFF800000> : vector<1xf32>
    %36 = vector.multi_reduction <maximumf>, %35, %cst_17 [1] : vector<1x128xf32> to vector<1xf32>
    %37 = vector.shape_cast %36 : vector<1xf32> to vector<1x1xf32>
    %c1 = arith.constant 1 : index
    %c0_18 = arith.constant 0 : index
    %38 = vector.load %arg6[%c1, %c0_18] : memref<2x1xf32, #tpu.memory_space<vmem>>, vector<1x1xf32>
    tpu.vector_store %arg6[%c1, %c0_18], %37 {strides = array<i32>} : memref<2x1xf32, #tpu.memory_space<vmem>>, vector<1x1xf32>,
    %c0_19 = arith.constant 0 : index
    %c0_20 = arith.constant 0 : index
    %39 = vector.load %arg4[%c0_19, %c0_20] : memref<128x512xf32, #tpu.memory_space<vmem>>, vector<128x512xf32>
    %cst_21 = arith.constant dense<0.000000e+00> : vector<1x512xf32>
    %40 = tpu.matmul %17, %39, %cst_21 {dimension_numbers = #tpu.dot_dimension_numbers<[1], [0], [0], [1], [0, 0, 1, 1], [], []>} : vector<1x128xf32>, vector<128x512xf32>, vector<1x512xf32> -> vector<1x512xf32>
    %c0_22 = arith.constant 0 : index
    %c0_23 = arith.constant 0 : index
    %41 = vector.load %arg5[%c0_22, %c0_23] : memref<1x512xf32, #tpu.memory_space<vmem>>, vector<1x512xf32>
    tpu.vector_store %arg5[%c0_22, %c0_23], %40 {strides = array<i32>} : memref<1x512xf32, #tpu.memory_space<vmem>>, vector<1x512xf32>,
    return
  }
}

</mosaic_0001>

<llo_original>
// kernel: patchcore_forward.1
$region0: #{patchcore_forward.1}
  #allocation0 [shape = 'u32[]', space=smem, size = 0x4, offset = 0x4, fixed_abs, tag = 'smem constant byte address 0x4 - core index']
  #allocation1 [shape = 'u32[72,128]{1,0:T(1,128)}', space=vmem, size = 0x9000, scoped, tag = 'internal scratch']
  %s0 = inlined_call_operand.vmem [shape: f32[12,128], index: 0, kind: input, shape index: {}]
  %s1 = inlined_call_operand.vmem [shape: f32[32,12], index: 1, kind: input, shape index: {}]
  %s2 = inlined_call_operand.vmem [shape: f32[64,32], index: 2, kind: input, shape index: {}]
  %s3 = inlined_call_operand.vmem [shape: f32[64,1], index: 3, kind: input, shape index: {}]
  %s4 = inlined_call_operand.vmem [shape: f32[128,512], index: 4, kind: input, shape index: {}]
  %s5 = inlined_call_operand.vmem [shape: f32[1,512], index: 5, kind: output, shape index: {0}]
  %s6 = inlined_call_operand.vmem [shape: f32[2,1], index: 6, kind: output, shape index: {1}]
  %7 = xla_tuple %s5, %s6
  %s8 = sld [smem:[#allocation0]]
  $region38: #{patchcore_forward.1} parent=0
    _
  %s10 = ssub.s32 1, %s8
  %s11 = scalar_select 0, %s10, %s8
  // Predicated region
  $region2: #{patchcore_forward.1} parent=0 // pred_check
    _
  $region3: #{patchcore_forward.1} parent=0 // pred_check_branch
    %13 = sbr.rel (0) target = $region5
  $region4: #{patchcore_forward.1} parent=0 // pred_region
    _
  $region5: #{patchcore_forward.1} parent=0 // pred_fallthru
    _
  // Predicated region
  $region6: #{patchcore_forward.1} parent=0 // pred_check
    _
  $region7: #{patchcore_forward.1} parent=0 // pred_check_branch
    %15 = sbr.rel (0) target = $region9
  $region8: #{patchcore_forward.1} parent=0 // pred_region
    _
  $region9: #{patchcore_forward.1} parent=0 // pred_fallthru
    _
  // Predicated region
  $region10: #{patchcore_forward.1} parent=0 // pred_check
    _
  $region11: #{patchcore_forward.1} parent=0 // pred_check_branch
    %17 = sbr.rel (0) target = $region13
  $region12: #{patchcore_forward.1} parent=0 // pred_region
    _
  $region13: #{patchcore_forward.1} parent=0 // pred_fallthru
    _
  // Predicated region
  $region14: #{patchcore_forward.1} parent=0 // pred_check
    _
  $region15: #{patchcore_forward.1} parent=0 // pred_check_branch
    %19 = sbr.rel (0) target = $region17
  $region16: #{patchcore_forward.1} parent=0 // pred_region
    _
  $region17: #{patchcore_forward.1} parent=0 // pred_fallthru
    _
  // Predicated region
  $region18: #{patchcore_forward.1} parent=0 // pred_check
    _
  $region19: #{patchcore_forward.1} parent=0 // pred_check_branch
    %21 = sbr.rel (0) target = $region21
  $region20: #{patchcore_forward.1} parent=0 // pred_region
    _
  $region21: #{patchcore_forward.1} parent=0 // pred_fallthru
    _
  %v22 = vld [vmem:[%s0] sm:$0xff]
  %v23 = vld [vmem:[%s0 + $0x8] sm:$0xf]
  %v24 = vld [vmem:[%s1] sm:$0xff]
  %v25 = vld [vmem:[%s1 + $0x8] sm:$0xff]
  %v26 = vld [vmem:[%s1 + $0x10] sm:$0xff]
  %v27 = vld [vmem:[%s1 + $0x18] sm:$0xff]
  %vm28 = vcmask 97280
  %v30 = vsel %vm28, %v24, 0
  %v33 = vsel %vm28, %v25, 0
  %v36 = vsel %vm28, %v26, 0
  %v39 = vsel %vm28, %v27, 0
  %vm41 = vcmask 1043456
  %v43 = vsel %vm41, %v23, 0
  %45 = vmatpush.msra.mxu0 0.0
  %46 = vmatpush.msra.mxu0 0.0
  %47 = vmatpush.msra.mxu0 0.0
  %48 = vmatpush.msra.mxu0 0.0
  %49 = vmatpush.msra.mxu0 0.0
  %50 = vmatpush.msra.mxu0 0.0
  %51 = vmatpush.msra.mxu0 0.0
  %52 = vmatpush.msra.mxu0 0.0
  %53 = vmatpush.msra.mxu0 0.0
  %54 = vmatpush.msra.mxu0 0.0
  %55 = vmatpush.msra.mxu0 0.0
  %56 = vmatpush.msra.mxu0 0.0
  %57 = vmatpush.msra.mxu0 0.0
  %58 = vmatpush.msra.mxu0 0.0
  %59 = vmatpush.msra.mxu0 %v43
  %60 = vmatpush.msra.mxu0 %v22
  %61 = vmatmul.f32.gmra.mxu0 %v30
  %v62 = vpop.f32.mrf.mxu0
  %v63 = vadd.f32 0.0, %v62
  %64 = vmatmul.f32.gmra.mxu0 %v33
  %v65 = vpop.f32.mrf.mxu0
  %v66 = vadd.f32 0.0, %v65
  %67 = vmatmul.f32.gmra.mxu0 %v36
  %v68 = vpop.f32.mrf.mxu0
  %v69 = vadd.f32 0.0, %v68
  %70 = vmatmul.f32.gmra.mxu0 %v39
  %v71 = vpop.f32.mrf.mxu0
  %v72 = vadd.f32 0.0, %v71
  %73 = vdwg.mxu0
  %v74 = vld [vmem:[%s2] sm:$0xff]
  %v75 = vld [vmem:[%s2 + $0x8] sm:$0xff]
  %v76 = vld [vmem:[%s2 + $0x10] sm:$0xff]
  %v77 = vld [vmem:[%s2 + $0x18] sm:$0xff]
  %v78 = vld [vmem:[%s2 + $0x20] sm:$0xff]
  %v79 = vld [vmem:[%s2 + $0x28] sm:$0xff]
  %v80 = vld [vmem:[%s2 + $0x30] sm:$0xff]
  %v81 = vld [vmem:[%s2 + $0x38] sm:$0xff]
  %vm82 = vcmask 261120
  %v84 = vsel %vm82, %v74, 0
  %v87 = vsel %vm82, %v75, 0
  %v90 = vsel %vm82, %v76, 0
  %v93 = vsel %vm82, %v77, 0
  %v96 = vsel %vm82, %v78, 0
  %v99 = vsel %vm82, %v79, 0
  %v102 = vsel %vm82, %v80, 0
  %v105 = vsel %vm82, %v81, 0
  %107 = vmatpush.msra.mxu0 0.0
  %108 = vmatpush.msra.mxu0 0.0
  %109 = vmatpush.msra.mxu0 0.0
  %110 = vmatpush.msra.mxu0 0.0
  %111 = vmatpush.msra.mxu0 0.0
  %112 = vmatpush.msra.mxu0 0.0
  %113 = vmatpush.msra.mxu0 0.0
  %114 = vmatpush.msra.mxu0 0.0
  %115 = vmatpush.msra.mxu0 0.0
  %116 = vmatpush.msra.mxu0 0.0
  %117 = vmatpush.msra.mxu0 0.0
  %118 = vmatpush.msra.mxu0 0.0
  %119 = vmatpush.msra.mxu0 %v72
  %120 = vmatpush.msra.mxu0 %v69
  %121 = vmatpush.msra.mxu0 %v66
  %122 = vmatpush.msra.mxu0 %v63
  %123 = vmatmul.f32.gmra.mxu0 %v84
  %v124 = vpop.f32.mrf.mxu0
  %v125 = vadd.f32 0.0, %v124
  %126 = vmatmul.f32.gmra.mxu0 %v87
  %v127 = vpop.f32.mrf.mxu0
  %v128 = vadd.f32 0.0, %v127
  %129 = vmatmul.f32.gmra.mxu0 %v90
  %v130 = vpop.f32.mrf.mxu0
  %v131 = vadd.f32 0.0, %v130
  %132 = vmatmul.f32.gmra.mxu0 %v93
  %v133 = vpop.f32.mrf.mxu0
  %v134 = vadd.f32 0.0, %v133
  %135 = vmatmul.f32.gmra.mxu0 %v96
  %v136 = vpop.f32.mrf.mxu0
  %v137 = vadd.f32 0.0, %v136
  %138 = vmatmul.f32.gmra.mxu0 %v99
  %v139 = vpop.f32.mrf.mxu0
  %v140 = vadd.f32 0.0, %v139
  %141 = vmatmul.f32.gmra.mxu0 %v102
  %v142 = vpop.f32.mrf.mxu0
  %v143 = vadd.f32 0.0, %v142
  %144 = vmatmul.f32.gmra.mxu0 %v105
  %v145 = vpop.f32.mrf.mxu0
  %v146 = vadd.f32 0.0, %v145
  %147 = vdwg.mxu0
  %v148 = vmul.f32 %v63, %v63
  %v149 = vmul.f32 %v66, %v66
  %v150 = vmul.f32 %v69, %v69
  %v151 = vmul.f32 %v72, %v72
  %v152 = vadd.f32 %v148, %v149
  %v153 = vadd.f32 %v152, %v150
  %v154 = vadd.f32 %v153, %v151
  %v155 = vrot.slane %v154, 4
  %v156 = vadd.f32 %v154, %v155
  %v157 = vrot.slane %v156, 2
  %v158 = vadd.f32 %v156, %v157
  %v159 = vrot.slane %v158, 1
  %v160 = vadd.f32 %v158, %v159
  %v161 = vadd.f32 %v160, %v125
  %v162 = vadd.f32 %v160, %v128
  %v163 = vadd.f32 %v160, %v131
  %v164 = vadd.f32 %v160, %v134
  %v165 = vadd.f32 %v160, %v137
  %v166 = vadd.f32 %v160, %v140
  %v167 = vadd.f32 %v160, %v143
  %v168 = vadd.f32 %v160, %v146
  %v169 = vld [vmem:[%s3] sm:$0xff]
  %v170 = vld [vmem:[%s3 + $0x8] sm:$0xff]
  %v171 = vld [vmem:[%s3 + $0x10] sm:$0xff]
  %v172 = vld [vmem:[%s3 + $0x18] sm:$0xff]
  %v173 = vld [vmem:[%s3 + $0x20] sm:$0xff]
  %v174 = vld [vmem:[%s3 + $0x28] sm:$0xff]
  %v175 = vld [vmem:[%s3 + $0x30] sm:$0xff]
  %v176 = vld [vmem:[%s3 + $0x38] sm:$0xff]
  %178 = vset.pattern.permute.xlu0 0
  %179 = vperm.xlu0 %178, %v169
  %v180 = vpop.permute.xlu0 %179
  %183 = vset.pattern.permute.xlu0 0
  %184 = vperm.xlu0 %183, %v170
  %v185 = vpop.permute.xlu0 %184
  %188 = vset.pattern.permute.xlu0 0
  %189 = vperm.xlu0 %188, %v171
  %v190 = vpop.permute.xlu0 %189
  %193 = vset.pattern.permute.xlu0 0
  %194 = vperm.xlu0 %193, %v172
  %v195 = vpop.permute.xlu0 %194
  %198 = vset.pattern.permute.xlu0 0
  %199 = vperm.xlu0 %198, %v173
  %v200 = vpop.permute.xlu0 %199
  %203 = vset.pattern.permute.xlu0 0
  %204 = vperm.xlu0 %203, %v174
  %v205 = vpop.permute.xlu0 %204
  %208 = vset.pattern.permute.xlu0 0
  %209 = vperm.xlu0 %208, %v175
  %v210 = vpop.permute.xlu0 %209
  %213 = vset.pattern.permute.xlu0 0
  %214 = vperm.xlu0 %213, %v176
  %v215 = vpop.permute.xlu0 %214
  %v217 = vadd.f32 %v161, %v180
  %v218 = vadd.f32 %v162, %v185
  %v219 = vadd.f32 %v163, %v190
  %v220 = vadd.f32 %v164, %v195
  %v221 = vadd.f32 %v165, %v200
  %v222 = vadd.f32 %v166, %v205
  %v223 = vadd.f32 %v167, %v210
  %v224 = vadd.f32 %v168, %v215
  %v225 = vmax.f32 %v217, 0.0
  %v226 = vmax.f32 %v218, 0.0
  %v227 = vmax.f32 %v219, 0.0
  %v228 = vmax.f32 %v220, 0.0
  %v229 = vmax.f32 %v221, 0.0
  %v230 = vmax.f32 %v222, 0.0
  %v231 = vmax.f32 %v223, 0.0
  %v232 = vmax.f32 %v224, 0.0
  %v233 = vmin.f32 %v225, %v229
  %v234 = vmin.f32 %v226, %v230
  %v235 = vmin.f32 %v227, %v231
  %v236 = vmin.f32 %v228, %v232
  %v237 = vmin.f32 %v233, %v234
  %v238 = vmin.f32 %v235, %v236
  %v239 = vmin.f32 %v237, %v238
  %v240 = vrot.slane %v239, 4
  %v241 = vmin.f32 %v239, %v240
  %v242 = vrot.slane %v241, 2
  %v243 = vmin.f32 %v241, %v242
  %v244 = vrot.slane %v243, 1
  %v245 = vmin.f32 %v243, %v244
  %v246 = vrsqrt.pop %v245
  %v247 = vmul.f32 %v246, %v245
  %v248 = vmul.f32 %v247, %v246
  %v249 = vmul.f32 0.5, %v248
  %v250 = vsub.f32 1.5, %v249
  %v251 = vmul.f32 %v246, %v250
  %v252 = vmul.f32 %v245, %v251
  %vm253 = vcmp.eq.f32.partialorder %v245, inf
  %v254 = vsel %vm253, %v245, %v252
  %vm255 = vcmp.eq.f32.partialorder %v245, 0.0
  %v256 = vand.u32 %v245, 2147483648
  %v257 = vsel %vm255, %v256, %v254
  %v258 = vlaneseq
  %v259 = vand.u32 %v258, 127
  %vm260 = vcmp.ge.s32.totalorder %v259, 0
  %vm261 = vcmp.lt.s32.totalorder %v259, 64
  %vm262 = vmand %vm260, %vm261
  %v263 = vsel %vm262, %v257, 0.0
  %264 = vmax.xlane.f32.xlu0 %v263
  %v265 = vpop.xlane.xlu0 %264
  %vm266 = vcmask 0
  %267 = vst.msk [vmem:[%s6] sm:$0x1] %vm266, %v265
  %vm268 = vcmp.ge.s32.totalorder %v259, 64
  %vm269 = vcmp.lt.s32.totalorder %v259, 128
  %vm270 = vmand %vm268, %vm269
  %v271 = vsel %vm270, %v257, 0.0
  %272 = vmax.xlane.f32.xlu0 %v271
  %v273 = vpop.xlane.xlu0 %272
  %274 = vst.msk [vmem:[%s6 + $0x1] sm:$0x1] %vm266, %v273
  %v275 = vld [vmem:[%s4] sm:$0xff]
  %v276 = vld [vmem:[%s4 + $0x8] sm:$0xff]
  %v277 = vld [vmem:[%s4 + $0x10] sm:$0xff]
  %v278 = vld [vmem:[%s4 + $0x18] sm:$0xff]
  %v279 = vld [vmem:[%s4 + $0x20] sm:$0xff]
  %v280 = vld [vmem:[%s4 + $0x28] sm:$0xff]
  %v281 = vld [vmem:[%s4 + $0x30] sm:$0xff]
  %v282 = vld [vmem:[%s4 + $0x38] sm:$0xff]
  %v283 = vld [vmem:[%s4 + $0x40] sm:$0xff]
  %v284 = vld [vmem:[%s4 + $0x48] sm:$0xff]
  %v285 = vld [vmem:[%s4 + $0x50] sm:$0xff]
  %v286 = vld [vmem:[%s4 + $0x58] sm:$0xff]
  %v287 = vld [vmem:[%s4 + $0x60] sm:$0xff]
  %v288 = vld [vmem:[%s4 + $0x68] sm:$0xff]
  %v289 = vld [vmem:[%s4 + $0x70] sm:$0xff]
  %v290 = vld [vmem:[%s4 + $0x78] sm:$0xff]
  %v291 = vld [vmem:[%s4 + $0x80] sm:$0xff]
  %v292 = vld [vmem:[%s4 + $0x88] sm:$0xff]
  %v293 = vld [vmem:[%s4 + $0x90] sm:$0xff]
  %v294 = vld [vmem:[%s4 + $0x98] sm:$0xff]
  %v295 = vld [vmem:[%s4 + $0xa0] sm:$0xff]
  %v296 = vld [vmem:[%s4 + $0xa8] sm:$0xff]
  %v297 = vld [vmem:[%s4 + $0xb0] sm:$0xff]
  %v298 = vld [vmem:[%s4 + $0xb8] sm:$0xff]
  %v299 = vld [vmem:[%s4 + $0xc0] sm:$0xff]
  %v300 = vld [vmem:[%s4 + $0xc8] sm:$0xff]
  %v301 = vld [vmem:[%s4 + $0xd0] sm:$0xff]
  %v302 = vld [vmem:[%s4 + $0xd8] sm:$0xff]
  %v303 = vld [vmem:[%s4 + $0xe0] sm:$0xff]
  %v304 = vld [vmem:[%s4 + $0xe8] sm:$0xff]
  %v305 = vld [vmem:[%s4 + $0xf0] sm:$0xff]
  %v306 = vld [vmem:[%s4 + $0xf8] sm:$0xff]
  %v307 = vld [vmem:[%s4 + $0x100] sm:$0xff]
  %v308 = vld [vmem:[%s4 + $0x108] sm:$0xff]
  %v309 = vld [vmem:[%s4 + $0x110] sm:$0xff]
  %v310 = vld [vmem:[%s4 + $0x118] sm:$0xff]
  %v311 = vld [vmem:[%s4 + $0x120] sm:$0xff]
  %v312 = vld [vmem:[%s4 + $0x128] sm:$0xff]
  %v313 = vld [vmem:[%s4 + $0x130] sm:$0xff]
  %v314 = vld [vmem:[%s4 + $0x138] sm:$0xff]
  %v315 = vld [vmem:[%s4 + $0x140] sm:$0xff]
  %v316 = vld [vmem:[%s4 + $0x148] sm:$0xff]
  %v317 = vld [vmem:[%s4 + $0x150] sm:$0xff]
  %v318 = vld [vmem:[%s4 + $0x158] sm:$0xff]
  %v319 = vld [vmem:[%s4 + $0x160] sm:$0xff]
  %v320 = vld [vmem:[%s4 + $0x168] sm:$0xff]
  %v321 = vld [vmem:[%s4 + $0x170] sm:$0xff]
  %v322 = vld [vmem:[%s4 + $0x178] sm:$0xff]
  %v323 = vld [vmem:[%s4 + $0x180] sm:$0xff]
  %v324 = vld [vmem:[%s4 + $0x188] sm:$0xff]
  %v325 = vld [vmem:[%s4 + $0x190] sm:$0xff]
  %v326 = vld [vmem:[%s4 + $0x198] sm:$0xff]
  %v327 = vld [vmem:[%s4 + $0x1a0] sm:$0xff]
  %v328 = vld [vmem:[%s4 + $0x1a8] sm:$0xff]
  %v329 = vld [vmem:[%s4 + $0x1b0] sm:$0xff]
  %v330 = vld [vmem:[%s4 + $0x1b8] sm:$0xff]
  %v331 = vld [vmem:[%s4 + $0x1c0] sm:$0xff]
  %v332 = vld [vmem:[%s4 + $0x1c8] sm:$0xff]
  %v333 = vld [vmem:[%s4 + $0x1d0] sm:$0xff]
  %v334 = vld [vmem:[%s4 + $0x1d8] sm:$0xff]
  %v335 = vld [vmem:[%s4 + $0x1e0] sm:$0xff]
  %v336 = vld [vmem:[%s4 + $0x1e8] sm:$0xff]
  %v337 = vld [vmem:[%s4 + $0x1f0] sm:$0xff]
  %v338 = vld [vmem:[%s4 + $0x1f8] sm:$0xff]
  %339 = vmatpush.msra.mxu0 %v335
  %340 = vmatpush.msra.mxu0 %v331
  %341 = vmatpush.msra.mxu0 %v327
  %342 = vmatpush.msra.mxu0 %v323
  %343 = vmatpush.msra.mxu0 %v319
  %344 = vmatpush.msra.mxu0 %v315
  %345 = vmatpush.msra.mxu0 %v311
  %346 = vmatpush.msra.mxu0 %v307
  %347 = vmatpush.msra.mxu0 %v303
  %348 = vmatpush.msra.mxu0 %v299
  %349 = vmatpush.msra.mxu0 %v295
  %350 = vmatpush.msra.mxu0 %v291
  %351 = vmatpush.msra.mxu0 %v287
  %352 = vmatpush.msra.mxu0 %v283
  %353 = vmatpush.msra.mxu0 %v279
  %354 = vmatpush.msra.mxu0 %v275
  %355 = vmatmul.f32.gmra.mxu0 %v257
  %v356 = vpop.f32.mrf.mxu0
  %v357 = vadd.f32 0.0, %v356
  %358 = vdwg.mxu0
  %359 = vmatpush.msra.mxu0 %v336
  %360 = vmatpush.msra.mxu0 %v332
  %361 = vmatpush.msra.mxu0 %v328
  %362 = vmatpush.msra.mxu0 %v324
  %363 = vmatpush.msra.mxu0 %v320
  %364 = vmatpush.msra.mxu0 %v316
  %365 = vmatpush.msra.mxu0 %v312
  %366 = vmatpush.msra.mxu0 %v308
  %367 = vmatpush.msra.mxu0 %v304
  %368 = vmatpush.msra.mxu0 %v300
  %369 = vmatpush.msra.mxu0 %v296
  %370 = vmatpush.msra.mxu0 %v292
  %371 = vmatpush.msra.mxu0 %v288
  %372 = vmatpush.msra.mxu0 %v284
  %373 = vmatpush.msra.mxu0 %v280
  %374 = vmatpush.msra.mxu0 %v276
  %375 = vmatmul.f32.gmra.mxu0 %v257
  %v376 = vpop.f32.mrf.mxu0
  %v377 = vadd.f32 0.0, %v376
  %378 = vdwg.mxu0
  %379 = vmatpush.msra.mxu0 %v337
  %380 = vmatpush.msra.mxu0 %v333
  %381 = vmatpush.msra.mxu0 %v329
  %382 = vmatpush.msra.mxu0 %v325
  %383 = vmatpush.msra.mxu0 %v321
  %384 = vmatpush.msra.mxu0 %v317
  %385 = vmatpush.msra.mxu0 %v313
  %386 = vmatpush.msra.mxu0 %v309
  %387 = vmatpush.msra.mxu0 %v305
  %388 = vmatpush.msra.mxu0 %v301
  %389 = vmatpush.msra.mxu0 %v297
  %390 = vmatpush.msra.mxu0 %v293
  %391 = vmatpush.msra.mxu0 %v289
  %392 = vmatpush.msra.mxu0 %v285
  %393 = vmatpush.msra.mxu0 %v281
  %394 = vmatpush.msra.mxu0 %v277
  %395 = vmatmul.f32.gmra.mxu0 %v257
  %v396 = vpop.f32.mrf.mxu0
  %v397 = vadd.f32 0.0, %v396
  %398 = vdwg.mxu0
  %399 = vmatpush.msra.mxu0 %v338
  %400 = vmatpush.msra.mxu0 %v334
  %401 = vmatpush.msra.mxu0 %v330
  %402 = vmatpush.msra.mxu0 %v326
  %403 = vmatpush.msra.mxu0 %v322
  %404 = vmatpush.msra.mxu0 %v318
  %405 = vmatpush.msra.mxu0 %v314
  %406 = vmatpush.msra.mxu0 %v310
  %407 = vmatpush.msra.mxu0 %v306
  %408 = vmatpush.msra.mxu0 %v302
  %409 = vmatpush.msra.mxu0 %v298
  %410 = vmatpush.msra.mxu0 %v294
  %411 = vmatpush.msra.mxu0 %v290
  %412 = vmatpush.msra.mxu0 %v286
  %413 = vmatpush.msra.mxu0 %v282
  %414 = vmatpush.msra.mxu0 %v278
  %415 = vmatmul.f32.gmra.mxu0 %v257
  %v416 = vpop.f32.mrf.mxu0
  %v417 = vadd.f32 0.0, %v416
  %418 = vdwg.mxu0
  %v423 = vrot.slane %v377, 7
  %v424 = vrot.slane %v397, 6
  %v425 = vrot.slane %v417, 5
  %vm426 = vcmask 1040384
  %v427 = vsel %vm426, %v357, %v423
  %vm428 = vcmask 1042434
  %v429 = vsel %vm428, %v424, %v425
  %vm430 = vcmask 1041408
  %v431 = vsel %vm430, %v427, %v429
  %v433 = vlaneseq
  %vm434 = vcmp.ge.s32.totalorder %v433, 0
  %vm435 = vcmp.lt.s32.totalorder %v433, 512
  %vm436 = vmand %vm434, %vm435
  %437 = vst.msk [vmem:[%s5] sm:$0xf] %vm436, %v431
  // Predicated region
  $region22: #{patchcore_forward.1} parent=0 // pred_check
    _
  $region23: #{patchcore_forward.1} parent=0 // pred_check_branch
    %439 = sbr.rel (0) target = $region25
  $region24: #{patchcore_forward.1} parent=0 // pred_region
    _
  $region25: #{patchcore_forward.1} parent=0 // pred_fallthru
    _
  // Predicated region
  $region26: #{patchcore_forward.1} parent=0 // pred_check
    _
  $region27: #{patchcore_forward.1} parent=0 // pred_check_branch
    %441 = sbr.rel (0) target = $region29
  $region28: #{patchcore_forward.1} parent=0 // pred_region
    _
  $region29: #{patchcore_forward.1} parent=0 // pred_fallthru
    _
  // Predicated region
  $region30: #{patchcore_forward.1} parent=0 // pred_check
    _
  $region31: #{patchcore_forward.1} parent=0 // pred_check_branch
    %443 = sbr.rel (0) target = $region33
  $region32: #{patchcore_forward.1} parent=0 // pred_region
    _
  $region33: #{patchcore_forward.1} parent=0 // pred_fallthru
    _
  // Predicated region
  $region34: #{patchcore_forward.1} parent=0 // pred_check
    _
  $region35: #{patchcore_forward.1} parent=0 // pred_check_branch
    %445 = sbr.rel (0) target = $region37
  $region36: #{patchcore_forward.1} parent=0 // pred_region
    _
  $region37: #{patchcore_forward.1} parent=0 // pred_fallthru
    _

</llo_original>
